<compile_context>
chip_gen: v6e
topology: v6e:2x2x1
jax: 0.10.0
libtpu: 0.0.40
codegen_flags: <defaults>
</compile_context>

<pallas_src>
import functools

import jax
import jax.numpy as jnp
from jax import lax
from jax.experimental import pallas as pl
from jax.experimental.pallas import tpu as pltpu

LANE = 128      # vreg lane width
SUBLANE = 8     # vreg sublane count
NEG = -1e30     # "minus infinity" bias for padded softmax lanes


def _round_up(n, m):
    return ((n + m - 1) // m) * m


# ---------------------------------------------------------------------------
# Parameter packing (done ONCE at init time, not per forward call)
# ---------------------------------------------------------------------------
def pack_params(w_h, b_h, w_o, b_o):
    """torch layout: w_h (H, I+H), w_o (O, I+H), b_h (H,), b_o (O,).

    Returns a lane-padded, pre-split, pre-transposed parameter set:
      w_x  : (I,  P)  multiplies the `input` slice of `combined`
      w_hh : (Hp, P)  multiplies the (lane-padded) hidden slice
      b    : (1,  P)
    with P = Hp + Op, Hp/Op = H/O rounded up to 128 lanes.  Lanes [0, H) hold
    the hidden Linear, lanes [Hp, Hp+O) the output Linear.  Padded hidden
    lanes have zero weight/bias (so the padded hidden state stays tanh(0)=0);
    padded output lanes get bias -1e30 so softmax gives them probability 0.
    """
    H, D = w_h.shape
    O = w_o.shape[0]
    I = D - H
    Hp = _round_up(H, LANE)
    Op = _round_up(O, LANE)
    P = Hp + Op

    w_full = jnp.zeros((D, P), jnp.float32)
    w_full = w_full.at[:, :H].set(w_h.T.astype(jnp.float32))
    w_full = w_full.at[:, Hp:Hp + O].set(w_o.T.astype(jnp.float32))

    b = jnp.zeros((1, P), jnp.float32)
    b = b.at[:, :H].set(b_h.astype(jnp.float32))
    b = b.at[:, Hp:Hp + O].set(b_o.astype(jnp.float32))
    b = b.at[:, Hp + O:].set(NEG)                    # kill padded softmax lanes

    w_x = w_full[:I]                                                   # (I, P)
    w_hh = jnp.zeros((Hp, P), jnp.float32).at[:H].set(w_full[I:])      # (Hp, P)

    dims = dict(I=I, H=H, O=O, Hp=Hp, Op=Op)
    return w_x, w_hh, b, dims


# ---------------------------------------------------------------------------
# Shared per-timestep cell math (operands already in VMEM / vregs)
# ---------------------------------------------------------------------------
def _step(x, h, w_x, w_hh, bb, Hp):
    """x:(B,I) h:(B,Hp) w_x:(I,P) w_hh:(Hp,P) bb:(B,P) -> (probs (B,Op), new_h (B,Hp))."""
    pre = (jnp.dot(x, w_x, preferred_element_type=jnp.float32)
           + jnp.dot(h, w_hh, preferred_element_type=jnp.float32)
           + bb)                                   # (B, Hp+Op), concat folded away
    new_h = jnp.tanh(pre[:, :Hp])                  # 128-lane-block aligned slice
    logits = pre[:, Hp:]                           # 128-lane-block aligned slice
    m = jnp.max(logits, axis=1, keepdims=True)
    e = jnp.exp(logits - m)                        # padded lanes -> exp(-1e30)=0
    s = jnp.sum(e, axis=1, keepdims=True)
    # Exact divide: approx=True (EUP vrcp) does not meet the 1e-5 reference tol.
    probs = e * pl.reciprocal(s, approx=False)
    return probs, new_h


# ---------------------------------------------------------------------------
# Single-step cell kernel (no grid, everything resident in VMEM)
# ---------------------------------------------------------------------------
def _cell_kernel(Hp, x_ref, h_ref, wx_ref, wh_ref, b_ref, out_ref, newh_ref):
    bb = jnp.broadcast_to(b_ref[...], (x_ref.shape[0], b_ref.shape[1]))
    probs, new_h = _step(x_ref[...], h_ref[...], wx_ref[...], wh_ref[...], bb, Hp)
    out_ref[...] = probs
    newh_ref[...] = new_h


def chatbot_cell(x, h, w_x, w_hh, b, *, dims):
    """One RNN-cell step. x:(B,I), h:(B,H). Returns (out (B,O), new_h (B,H))."""
    B, I = x.shape
    H, O, Hp, Op = dims["H"], dims["O"], dims["Hp"], dims["Op"]
    Bp = max(SUBLANE, _round_up(B, SUBLANE))

    xp = jnp.zeros((Bp, I), jnp.float32).at[:B].set(x)
    hp = jnp.zeros((Bp, Hp), jnp.float32).at[:B, :H].set(h)

    vmem = lambda: pl.BlockSpec(memory_space=pltpu.MemorySpace.VMEM)
    out_p, newh_p = pl.pallas_call(
        functools.partial(_cell_kernel, Hp),
        out_shape=(
            jax.ShapeDtypeStruct((Bp, Op), jnp.float32),
            jax.ShapeDtypeStruct((Bp, Hp), jnp.float32),
        ),
        in_specs=[vmem()] * 5,
        out_specs=(vmem(), vmem()),
    )(xp, hp, w_x, w_hh, b)
    return out_p[:B, :O], newh_p[:B, :H]


# ---------------------------------------------------------------------------
# Whole-sequence kernel: single no-grid pallas_call, in-kernel fori_loop
# ---------------------------------------------------------------------------
def _seq_kernel(T, Hp, xs_ref, h0_ref, wx_ref, wh_ref, b_ref, out_ref, hT_ref):
    # Hoist weight loads and bias broadcast out of the timestep loop.
    w_x = wx_ref[...]
    w_hh = wh_ref[...]
    bb = jnp.broadcast_to(b_ref[...], (h0_ref.shape[0], b_ref.shape[1]))

    def body(t, h):
        probs, new_h = _step(xs_ref[t], h, w_x, w_hh, bb, Hp)
        out_ref[t] = probs                 # lane-dense (Bp, Op) store
        return new_h                       # hidden carried as a loop value

    hT = lax.fori_loop(0, T, body, h0_ref[...], unroll=True)
    hT_ref[...] = hT


def chatbot_sequence(xs, h0, w_x, w_hh, b, *, dims):
    """xs:(T,B,I), h0:(B,H). Returns (outs (T,B,O), final hidden (B,H))."""
    T, B, I = xs.shape
    H, O, Hp, Op = dims["H"], dims["O"], dims["Hp"], dims["Op"]
    Bp = max(SUBLANE, _round_up(B, SUBLANE))

    xsp = jnp.zeros((T, Bp, I), jnp.float32).at[:, :B].set(xs)
    h0p = jnp.zeros((Bp, Hp), jnp.float32).at[:B, :H].set(h0)

    vmem = lambda: pl.BlockSpec(memory_space=pltpu.MemorySpace.VMEM)
    outs_p, hT_p = pl.pallas_call(
        functools.partial(_seq_kernel, T, Hp),
        out_shape=(
            jax.ShapeDtypeStruct((T, Bp, Op), jnp.float32),
            jax.ShapeDtypeStruct((Bp, Hp), jnp.float32),
        ),
        in_specs=[vmem()] * 5,
        out_specs=(vmem(), vmem()),
    )(xsp, h0p, w_x, w_hh, b)
    return outs_p[:, :B, :O], hT_p[:B, :H]


# ---------------------------------------------------------------------------
# Pure-JAX reference (mirrors torch forward)
# ---------------------------------------------------------------------------
def reference_cell(x, h, w_h, b_h, w_o, b_o):
    combined = jnp.concatenate([x, h], axis=1)
    new_h = jnp.tanh(combined @ w_h.T + b_h)
    out = jax.nn.softmax(combined @ w_o.T + b_o, axis=1)
    return out, new_h


if __name__ == "__main__":
    # Shapes consistent with the module: hidden_size = 128, I = O = len(keywords).
    B = 2             # batch
    INPUT_SIZE = 8    # len(keywords)
    HIDDEN_SIZE = 128
    OUTPUT_SIZE = 8   # len(keywords)
    T = 8             # sequence length for the fused-sequence kernel

    key = jax.random.PRNGKey(0)
    ks = jax.random.split(key, 7)
    D = INPUT_SIZE + HIDDEN_SIZE

    # torch nn.Linear parameter layout
    w_h = jax.random.normal(ks[0], (HIDDEN_SIZE, D), jnp.float32) * 0.1
    b_h = jax.random.normal(ks[1], (HIDDEN_SIZE,), jnp.float32) * 0.1
    w_o = jax.random.normal(ks[2], (OUTPUT_SIZE, D), jnp.float32) * 0.1
    b_o = jax.random.normal(ks[3], (OUTPUT_SIZE,), jnp.float32) * 0.1

    x = jax.random.normal(ks[4], (B, INPUT_SIZE), jnp.float32)
    h0 = jax.random.normal(ks[5], (B, HIDDEN_SIZE), jnp.float32)
    xs = jax.random.normal(ks[6], (T, B, INPUT_SIZE), jnp.float32)

    # Pack / pad / split weights once (amortized out of the per-step path).
    w_x, w_hh, b_packed, dims = pack_params(w_h, b_h, w_o, b_o)

    # ----- single-step cell -----
    cell = jax.jit(functools.partial(chatbot_cell, dims=dims))
    out, new_h = cell(x, h0, w_x, w_hh, b_packed)
    jax.block_until_ready((out, new_h))

    ref_out, ref_h = reference_cell(x, h0, w_h, b_h, w_o, b_o)
    assert jnp.allclose(out, ref_out, atol=1e-5, rtol=1e-5)
    assert jnp.allclose(new_h, ref_h, atol=1e-5, rtol=1e-5)
    assert bool(jnp.all(jnp.abs(jnp.sum(out, axis=1) - 1.0) < 1e-5))

    # ----- full sequence in a single no-grid pallas_call -----
    seq = jax.jit(functools.partial(chatbot_sequence, dims=dims))
    outs, hT = seq(xs, h0, w_x, w_hh, b_packed)
    jax.block_until_ready((outs, hT))

    h = h0
    ref_outs = []
    for t in range(T):
        o_t, h = reference_cell(xs[t], h, w_h, b_h, w_o, b_o)
        ref_outs.append(o_t)
    ref_outs = jnp.stack(ref_outs, axis=0)
    assert jnp.allclose(outs, ref_outs, atol=1e-5, rtol=1e-5)
    assert jnp.allclose(hT, h, atol=1e-5, rtol=1e-5)

    print("KERNEL_OK")
</pallas_src>

<mosaic_0001>
module attributes {stable_mosaic.version = 11 : i64} {
  func.func @_cell_kernel(%arg0: memref<8x8xf32, #tpu.memory_space<vmem>>, %arg1: memref<8x128xf32, #tpu.memory_space<vmem>>, %arg2: memref<8x256xf32, #tpu.memory_space<vmem>>, %arg3: memref<128x256xf32, #tpu.memory_space<vmem>>, %arg4: memref<1x256xf32, #tpu.memory_space<vmem>>, %arg5: memref<8x128xf32, #tpu.memory_space<vmem>>, %arg6: memref<8x128xf32, #tpu.memory_space<vmem>>) attributes {dimension_semantics = [], scalar_prefetch = 0 : i64, scratch_operands = 0 : i64, tpu.core_type = #tpu.core_type<tc>} {
    %c0 = arith.constant 0 : index
    %c0_0 = arith.constant 0 : index
    %0 = vector.load %arg4[%c0, %c0_0] : memref<1x256xf32, #tpu.memory_space<vmem>>, vector<1x256xf32>
    %1 = vector.shape_cast %0 : vector<1x256xf32> to vector<1x256xf32>
    %2 = vector.broadcast %1 : vector<1x256xf32> to vector<8x256xf32>
    %c0_1 = arith.constant 0 : index
    %c0_2 = arith.constant 0 : index
    %3 = vector.load %arg0[%c0_1, %c0_2] : memref<8x8xf32, #tpu.memory_space<vmem>>, vector<8x8xf32>
    %c0_3 = arith.constant 0 : index
    %c0_4 = arith.constant 0 : index
    %4 = vector.load %arg1[%c0_3, %c0_4] : memref<8x128xf32, #tpu.memory_space<vmem>>, vector<8x128xf32>
    %c0_5 = arith.constant 0 : index
    %c0_6 = arith.constant 0 : index
    %5 = vector.load %arg2[%c0_5, %c0_6] : memref<8x256xf32, #tpu.memory_space<vmem>>, vector<8x256xf32>
    %c0_7 = arith.constant 0 : index
    %c0_8 = arith.constant 0 : index
    %6 = vector.load %arg3[%c0_7, %c0_8] : memref<128x256xf32, #tpu.memory_space<vmem>>, vector<128x256xf32>
    %cst = arith.constant dense<0.000000e+00> : vector<8x256xf32>
    %7 = tpu.matmul %3, %5, %cst {dimension_numbers = #tpu.dot_dimension_numbers<[1], [0], [0], [1], [0, 0, 1, 1], [], []>} : vector<8x8xf32>, vector<8x256xf32>, vector<8x256xf32> -> vector<8x256xf32>
    %cst_9 = arith.constant dense<0.000000e+00> : vector<8x256xf32>
    %8 = tpu.matmul %4, %6, %cst_9 {dimension_numbers = #tpu.dot_dimension_numbers<[1], [0], [0], [1], [0, 0, 1, 1], [], []>} : vector<8x128xf32>, vector<128x256xf32>, vector<8x256xf32> -> vector<8x256xf32>
    %9 = arith.addf %7, %8 : vector<8x256xf32>
    %10 = arith.addf %9, %2 : vector<8x256xf32>
    %11 = vector.extract_strided_slice %10 {offsets = [0, 0], sizes = [8, 128], strides = [1, 1]} : vector<8x256xf32> to vector<8x128xf32>
    %12 = math.tanh %11 : vector<8x128xf32>
    %13 = vector.extract_strided_slice %10 {offsets = [0, 128], sizes = [8, 128], strides = [1, 1]} : vector<8x256xf32> to vector<8x128xf32>
    %cst_10 = arith.constant dense<0xFF800000> : vector<8xf32>
    %14 = vector.multi_reduction <maximumf>, %13, %cst_10 [1] : vector<8x128xf32> to vector<8xf32>
    %15 = vector.shape_cast %14 : vector<8xf32> to vector<8x1xf32>
    %16 = vector.broadcast %15 : vector<8x1xf32> to vector<8x128xf32>
    %17 = arith.subf %13, %16 : vector<8x128xf32>
    %18 = math.exp %17 : vector<8x128xf32>
    %cst_11 = arith.constant dense<0.000000e+00> : vector<8xf32>
    %19 = vector.multi_reduction <add>, %18, %cst_11 [1] : vector<8x128xf32> to vector<8xf32>
    %20 = vector.shape_cast %19 : vector<8xf32> to vector<8x1xf32>
    %21 = tpu.reciprocal %20 : vector<8x1xf32> -> vector<8x1xf32>
    %22 = vector.broadcast %21 : vector<8x1xf32> to vector<8x128xf32>
    %23 = arith.mulf %18, %22 : vector<8x128xf32>
    %c0_12 = arith.constant 0 : index
    %c0_13 = arith.constant 0 : index
    %24 = vector.load %arg5[%c0_12, %c0_13] : memref<8x128xf32, #tpu.memory_space<vmem>>, vector<8x128xf32>
    tpu.vector_store %arg5[%c0_12, %c0_13], %23 {strides = array<i32>} : memref<8x128xf32, #tpu.memory_space<vmem>>, vector<8x128xf32>,
    %c0_14 = arith.constant 0 : index
    %c0_15 = arith.constant 0 : index
    %25 = vector.load %arg6[%c0_14, %c0_15] : memref<8x128xf32, #tpu.memory_space<vmem>>, vector<8x128xf32>
    tpu.vector_store %arg6[%c0_14, %c0_15], %12 {strides = array<i32>} : memref<8x128xf32, #tpu.memory_space<vmem>>, vector<8x128xf32>,
    return
  }
}

</mosaic_0001>

<llo_original>
// kernel: chatbot_cell.1
$region0: #{chatbot_cell.1}
  #allocation0 [shape = 'u32[]', space=smem, size = 0x4, offset = 0x4, fixed_abs, tag = 'smem constant byte address 0x4 - core index']
  #allocation1 [shape = 'u32[144,128]{1,0:T(1,128)}', space=vmem, size = 0x12000, scoped, tag = 'internal scratch']
  %s0 = inlined_call_operand.vmem [shape: f32[8,8], index: 0, kind: input, shape index: {}]
  %s1 = inlined_call_operand.vmem [shape: f32[8,128], index: 1, kind: input, shape index: {}]
  %s2 = inlined_call_operand.vmem [shape: f32[8,256], index: 2, kind: input, shape index: {}]
  %s3 = inlined_call_operand.hbm [shape: f32[128,256], index: 3, kind: input, shape index: {}]
  %s4 = inlined_call_operand.vmem [shape: f32[1,256], index: 4, kind: input, shape index: {}]
  %s5 = inlined_call_operand.vmem [shape: f32[8,128], index: 5, kind: output, shape index: {0}]
  %s6 = inlined_call_operand.vmem [shape: f32[8,128], index: 6, kind: output, shape index: {1}]
  %7 = xla_tuple %s5, %s6
  %s8 = sld [smem:[#allocation0]]
  $region42: #{chatbot_cell.1} parent=0
    _
  %s10 = ssub.s32 1, %s8
  %s11 = scalar_select 0, %s10, %s8
  $region1: #{chatbot_cell.1} parent=0
    #allocation2 [shape = 'u8[131072]{0}', space=vmem, size = 0x20000, scoped, tag = 'input window, operand 3, single buffered']
    #allocation3 [shape = 's32[1]{0}', space=sflag, size = 0x4, scoped, tag = 'scoped memory for chatbot_cell.1']
    %12 = vsyncpa [#allocation3], 0
    // Predicated region
    $region2: #{chatbot_cell.1} parent=1 // pred_check
      _
    $region3: #{chatbot_cell.1} parent=1 // pred_check_branch
      %14 = sbr.rel (0) target = $region5
    $region4: #{chatbot_cell.1} parent=1 // pred_region
      _
    $region5: #{chatbot_cell.1} parent=1 // pred_fallthru
      _
    // Predicated region
    $region6: #{chatbot_cell.1} parent=1 // pred_check
      _
    $region7: #{chatbot_cell.1} parent=1 // pred_check_branch
      %16 = sbr.rel (0) target = $region9
    $region8: #{chatbot_cell.1} parent=1 // pred_region
      _
    $region9: #{chatbot_cell.1} parent=1 // pred_fallthru
      _
    // Predicated region
    $region10: #{chatbot_cell.1} parent=1 // pred_check
      _
    $region11: #{chatbot_cell.1} parent=1 // pred_check_branch
      %18 = sbr.rel (0) target = $region13
    $region12: #{chatbot_cell.1} parent=1 // pred_region
      _
    $region13: #{chatbot_cell.1} parent=1 // pred_fallthru
      _
    // Predicated region
    $region14: #{chatbot_cell.1} parent=1 // pred_check
      _
    $region15: #{chatbot_cell.1} parent=1 // pred_check_branch
      %20 = sbr.rel (0) target = $region17
    $region16: #{chatbot_cell.1} parent=1 // pred_region
      %s22 = ssub.s32 4096, 4096
      %23 = vsyncadd [#allocation3], %s22
      %s24 = sshll.u32 [#allocation2], 4
      %s25 = int_to_ptr.vmem [resolvable:$true] %s24
      %30 = dma.hbm_to_vmem [thread:$0]  %s3, 4096, %s25, [#allocation3], 256, 256, 16
    $region17: #{chatbot_cell.1} parent=1 // pred_fallthru
      _
    // Predicated region
    $region18: #{chatbot_cell.1} parent=1 // pred_check
      _
    $region19: #{chatbot_cell.1} parent=1 // pred_check_branch
      %32 = sbr.rel (0) target = $region21
    $region20: #{chatbot_cell.1} parent=1 // pred_region
      _
    $region21: #{chatbot_cell.1} parent=1 // pred_fallthru
      _
    // Predicated region
    $region22: #{chatbot_cell.1} parent=1 // pred_check
      _
    $region23: #{chatbot_cell.1} parent=1 // pred_check_branch
      %34 = sbr.rel (0) target = $region25
    $region24: #{chatbot_cell.1} parent=1 // pred_region
      %35 = dma.done [#allocation3], 4096
    $region25: #{chatbot_cell.1} parent=1 // pred_fallthru
      _
    %v36 = vld [vmem:[%s4] sm:$0x3]
    %v38 = vlaneseq
    %v39 = vshrl.u32 %v38, 7
    %v40 = vsub.s32 0, %v39
    %v41 = vrot.slane %v36, %v40
    %v42 = vlaneseq
    %v43 = vshrl.u32 %v42, 7
    %v44 = vsub.s32 1, %v43
    %v45 = vrot.slane %v36, %v44
    %v48 = vld [vmem:[%s0] sm:$0xff]
    %v49 = vld [vmem:[%s1] sm:$0xff]
    %v50 = vld [vmem:[%s2] sm:$0xff]
    %v51 = vld [vmem:[%s2 + $0x8] sm:$0xff]
    %v52 = vld [vmem:[#allocation2] sm:$0xff]
    %v53 = vld [vmem:[#allocation2 + $0x8] sm:$0xff]
    %v54 = vld [vmem:[#allocation2 + $0x10] sm:$0xff]
    %v55 = vld [vmem:[#allocation2 + $0x18] sm:$0xff]
    %v56 = vld [vmem:[#allocation2 + $0x20] sm:$0xff]
    %v57 = vld [vmem:[#allocation2 + $0x28] sm:$0xff]
    %v58 = vld [vmem:[#allocation2 + $0x30] sm:$0xff]
    %v59 = vld [vmem:[#allocation2 + $0x38] sm:$0xff]
    %v60 = vld [vmem:[#allocation2 + $0x40] sm:$0xff]
    %v61 = vld [vmem:[#allocation2 + $0x48] sm:$0xff]
    %v62 = vld [vmem:[#allocation2 + $0x50] sm:$0xff]
    %v63 = vld [vmem:[#allocation2 + $0x58] sm:$0xff]
    %v64 = vld [vmem:[#allocation2 + $0x60] sm:$0xff]
    %v65 = vld [vmem:[#allocation2 + $0x68] sm:$0xff]
    %v66 = vld [vmem:[#allocation2 + $0x70] sm:$0xff]
    %v67 = vld [vmem:[#allocation2 + $0x78] sm:$0xff]
    %v68 = vld [vmem:[#allocation2 + $0x80] sm:$0xff]
    %v69 = vld [vmem:[#allocation2 + $0x88] sm:$0xff]
    %v70 = vld [vmem:[#allocation2 + $0x90] sm:$0xff]
    %v71 = vld [vmem:[#allocation2 + $0x98] sm:$0xff]
    %v72 = vld [vmem:[#allocation2 + $0xa0] sm:$0xff]
    %v73 = vld [vmem:[#allocation2 + $0xa8] sm:$0xff]
    %v74 = vld [vmem:[#allocation2 + $0xb0] sm:$0xff]
    %v75 = vld [vmem:[#allocation2 + $0xb8] sm:$0xff]
    %v76 = vld [vmem:[#allocation2 + $0xc0] sm:$0xff]
    %v77 = vld [vmem:[#allocation2 + $0xc8] sm:$0xff]
    %v78 = vld [vmem:[#allocation2 + $0xd0] sm:$0xff]
    %v79 = vld [vmem:[#allocation2 + $0xd8] sm:$0xff]
    %v80 = vld [vmem:[#allocation2 + $0xe0] sm:$0xff]
    %v81 = vld [vmem:[#allocation2 + $0xe8] sm:$0xff]
    %v82 = vld [vmem:[#allocation2 + $0xf0] sm:$0xff]
    %v83 = vld [vmem:[#allocation2 + $0xf8] sm:$0xff]
    %84 = vmatprep.subr.mxu0 %v83
    %85 = vmatpush1.msra.mxu0 %v82
    %86 = vmatprep.subr.mxu0 %v81
    %87 = vmatpush1.msra.mxu0 %v80
    %88 = vmatprep.subr.mxu0 %v79
    %89 = vmatpush1.msra.mxu0 %v78
    %90 = vmatprep.subr.mxu0 %v77
    %91 = vmatpush1.msra.mxu0 %v76
    %92 = vmatprep.subr.mxu0 %v75
    %93 = vmatpush1.msra.mxu0 %v74
    %94 = vmatprep.subr.mxu0 %v73
    %95 = vmatpush1.msra.mxu0 %v72
    %96 = vmatprep.subr.mxu0 %v71
    %97 = vmatpush1.msra.mxu0 %v70
    %98 = vmatprep.subr.mxu0 %v69
    %99 = vmatpush1.msra.mxu0 %v68
    %100 = vmatprep.subr.mxu0 %v67
    %101 = vmatpush1.msra.mxu0 %v66
    %102 = vmatprep.subr.mxu0 %v65
    %103 = vmatpush1.msra.mxu0 %v64
    %104 = vmatprep.subr.mxu0 %v63
    %105 = vmatpush1.msra.mxu0 %v62
    %106 = vmatprep.subr.mxu0 %v61
    %107 = vmatpush1.msra.mxu0 %v60
    %108 = vmatprep.subr.mxu0 %v59
    %109 = vmatpush1.msra.mxu0 %v58
    %110 = vmatprep.subr.mxu0 %v57
    %111 = vmatpush1.msra.mxu0 %v56
    %112 = vmatprep.subr.mxu0 %v55
    %113 = vmatpush1.msra.mxu0 %v54
    %114 = vmatprep.subr.mxu0 %v53
    %115 = vmatpush1.msra.mxu0 %v52
    %116 = vmatprep.subr.mxu0 0.0
    %117 = vmatpush2.msra.mxu0 0.0
    %118 = vmatprep.subr.mxu0 0.0
    %119 = vmatpush2.msra.mxu0 0.0
    %120 = vmatprep.subr.mxu0 0.0
    %121 = vmatpush2.msra.mxu0 0.0
    %122 = vmatprep.subr.mxu0 0.0
    %123 = vmatpush2.msra.mxu0 0.0
    %124 = vmatprep.subr.mxu0 0.0
    %125 = vmatpush2.msra.mxu0 0.0
    %126 = vmatprep.subr.mxu0 0.0
    %127 = vmatpush2.msra.mxu0 0.0
    %128 = vmatprep.subr.mxu0 0.0
    %129 = vmatpush2.msra.mxu0 0.0
    %130 = vmatprep.subr.mxu0 0.0
    %131 = vmatpush2.msra.mxu0 0.0
    %132 = vmatprep.subr.mxu0 0.0
    %133 = vmatpush2.msra.mxu0 0.0
    %134 = vmatprep.subr.mxu0 0.0
    %135 = vmatpush2.msra.mxu0 0.0
    %136 = vmatprep.subr.mxu0 0.0
    %137 = vmatpush2.msra.mxu0 0.0
    %138 = vmatprep.subr.mxu0 0.0
    %139 = vmatpush2.msra.mxu0 0.0
    %140 = vmatprep.subr.mxu0 0.0
    %141 = vmatpush2.msra.mxu0 0.0
    %142 = vmatprep.subr.mxu0 0.0
    %143 = vmatpush2.msra.mxu0 0.0
    %144 = vmatprep.subr.mxu0 0.0
    %145 = vmatpush2.msra.mxu0 0.0
    %146 = vmatprep.subr.mxu0 0.0
    %147 = vmatpush2.msra.mxu0 0.0
    %148 = vmatprep.mubr.f32.mxu0 0.0
    %149 = vmatmul.mubr.f32.gmra.mxu0 %v49
    %v150 = vpop.f32.mrf.mxu0
    %v151 = vadd.f32 0.0, %v150
    %v152 = vpop.f32.mrf.mxu0
    %v153 = vadd.f32 0.0, %v152
    %154 = vdwg.mxu0
    %vm155 = vcmask 64512
    %v157 = vsel %vm155, %v48, 0
    %159 = vmatprep.subr.mxu0 0.0
    %160 = vmatpush1.msra.mxu0 0.0
    %161 = vmatprep.subr.mxu0 0.0
    %162 = vmatpush1.msra.mxu0 0.0
    %163 = vmatprep.subr.mxu0 0.0
    %164 = vmatpush1.msra.mxu0 0.0
    %165 = vmatprep.subr.mxu0 0.0
    %166 = vmatpush1.msra.mxu0 0.0
    %167 = vmatprep.subr.mxu0 0.0
    %168 = vmatpush1.msra.mxu0 0.0
    %169 = vmatprep.subr.mxu0 0.0
    %170 = vmatpush1.msra.mxu0 0.0
    %171 = vmatprep.subr.mxu0 0.0
    %172 = vmatpush1.msra.mxu0 0.0
    %173 = vmatprep.subr.mxu0 0.0
    %174 = vmatpush1.msra.mxu0 0.0
    %175 = vmatprep.subr.mxu0 0.0
    %176 = vmatpush1.msra.mxu0 0.0
    %177 = vmatprep.subr.mxu0 0.0
    %178 = vmatpush1.msra.mxu0 0.0
    %179 = vmatprep.subr.mxu0 0.0
    %180 = vmatpush1.msra.mxu0 0.0
    %181 = vmatprep.subr.mxu0 0.0
    %182 = vmatpush1.msra.mxu0 0.0
    %183 = vmatprep.subr.mxu0 0.0
    %184 = vmatpush1.msra.mxu0 0.0
    %185 = vmatprep.subr.mxu0 0.0
    %186 = vmatpush1.msra.mxu0 0.0
    %187 = vmatprep.subr.mxu0 0.0
    %188 = vmatpush1.msra.mxu0 0.0
    %189 = vmatprep.subr.mxu0 %v51
    %190 = vmatpush1.msra.mxu0 %v50
    %191 = vmatprep.subr.mxu0 0.0
    %192 = vmatpush2.msra.mxu0 0.0
    %193 = vmatprep.subr.mxu0 0.0
    %194 = vmatpush2.msra.mxu0 0.0
    %195 = vmatprep.subr.mxu0 0.0
    %196 = vmatpush2.msra.mxu0 0.0
    %197 = vmatprep.subr.mxu0 0.0
    %198 = vmatpush2.msra.mxu0 0.0
    %199 = vmatprep.subr.mxu0 0.0
    %200 = vmatpush2.msra.mxu0 0.0
    %201 = vmatprep.subr.mxu0 0.0
    %202 = vmatpush2.msra.mxu0 0.0
    %203 = vmatprep.subr.mxu0 0.0
    %204 = vmatpush2.msra.mxu0 0.0
    %205 = vmatprep.subr.mxu0 0.0
    %206 = vmatpush2.msra.mxu0 0.0
    %207 = vmatprep.subr.mxu0 0.0
    %208 = vmatpush2.msra.mxu0 0.0
    %209 = vmatprep.subr.mxu0 0.0
    %210 = vmatpush2.msra.mxu0 0.0
    %211 = vmatprep.subr.mxu0 0.0
    %212 = vmatpush2.msra.mxu0 0.0
    %213 = vmatprep.subr.mxu0 0.0
    %214 = vmatpush2.msra.mxu0 0.0
    %215 = vmatprep.subr.mxu0 0.0
    %216 = vmatpush2.msra.mxu0 0.0
    %217 = vmatprep.subr.mxu0 0.0
    %218 = vmatpush2.msra.mxu0 0.0
    %219 = vmatprep.subr.mxu0 0.0
    %220 = vmatpush2.msra.mxu0 0.0
    %221 = vmatprep.subr.mxu0 0.0
    %222 = vmatpush2.msra.mxu0 0.0
    %223 = vmatprep.mubr.f32.mxu0 0.0
    %224 = vmatmul.mubr.f32.gmra.mxu0 %v157
    %v225 = vpop.f32.mrf.mxu0
    %v226 = vadd.f32 %v151, %v225
    %v227 = vpop.f32.mrf.mxu0
    %v228 = vadd.f32 %v153, %v227
    %229 = vdwg.mxu0
    %v230 = vadd.f32 %v226, %v41
    %v231 = vadd.f32 %v228, %v45
    %v232 = vtanh.pop %v230
    %233 = vmax.xlane.f32.xlu0 %v231
    %v234 = vpop.xlane.xlu0 %233
    %v235 = vsub.f32 %v231, %v234
    %v236 = vmul.f32 %v235, 1.442695
    %v237 = vpow.pop %v236
    %238 = vadd.xlane.f32.xlu0 %v237
    %v239 = vpop.xlane.xlu0 %238
    %v240 = vrcp.pop %v239
    %v241 = vmul.f32 %v237, %v240
    %242 = vst [vmem:[%s5] sm:$0xff] %v241
    %243 = vst [vmem:[%s6] sm:$0xff] %v232
    // Predicated region
    $region26: #{chatbot_cell.1} parent=1 // pred_check
      _
    $region27: #{chatbot_cell.1} parent=1 // pred_check_branch
      %245 = sbr.rel (0) target = $region29
    $region28: #{chatbot_cell.1} parent=1 // pred_region
      _
    $region29: #{chatbot_cell.1} parent=1 // pred_fallthru
      _
    // Predicated region
    $region30: #{chatbot_cell.1} parent=1 // pred_check
      _
    $region31: #{chatbot_cell.1} parent=1 // pred_check_branch
      %247 = sbr.rel (0) target = $region33
    $region32: #{chatbot_cell.1} parent=1 // pred_region
      _
    $region33: #{chatbot_cell.1} parent=1 // pred_fallthru
      _
    // Predicated region
    $region34: #{chatbot_cell.1} parent=1 // pred_check
      _
    $region35: #{chatbot_cell.1} parent=1 // pred_check_branch
      %249 = sbr.rel (0) target = $region37
    $region36: #{chatbot_cell.1} parent=1 // pred_region
      _
    $region37: #{chatbot_cell.1} parent=1 // pred_fallthru
      _
    // Predicated region
    $region38: #{chatbot_cell.1} parent=1 // pred_check
      _
    $region39: #{chatbot_cell.1} parent=1 // pred_check_branch
      %251 = sbr.rel (0) target = $region41
    $region40: #{chatbot_cell.1} parent=1 // pred_region
      _
    $region41: #{chatbot_cell.1} parent=1 // pred_fallthru
      _
    %252 = vsyncpa [#allocation3], 1

</llo_original>
